<compile_context>
chip_gen: v7x
topology: tpu7x:2x2x1
jax: 0.10.0
libtpu: 0.0.40
codegen_flags: <defaults>
</compile_context>

<pallas_src>
import functools

import jax
import jax.numpy as jnp
from jax.experimental import pallas as pl
from jax.experimental.pallas import tpu as pltpu

T = 20            # DDPMDiffusionScheduler(T=self.T) with self.T = 20
T_EMB_DIM = 64    # t_embedding_dim; final embedding width = 2 * 64 = 128
EMB_W = 2 * T_EMB_DIM
TBL_W = EMB_W + 2   # [cos|sin emb (128) | sqrt_alpha_bar | sqrt_one_minus_alpha_bar]
BETA_MIN, BETA_MAX = 1e-4, 0.02


def ddpm_tables(t_steps=T, beta_min=BETA_MIN, beta_max=BETA_MAX):
    betas = jnp.linspace(beta_min, beta_max, t_steps, dtype=jnp.float32)
    alphas = 1.0 - betas
    alpha_bars = jnp.cumprod(alphas)
    return jnp.sqrt(alpha_bars), jnp.sqrt(1.0 - alpha_bars)   # (T,), (T,)


def time_embedding_table(t_steps=T, dim=T_EMB_DIM):
    # get_time_embedding applied to t_int = arange(T)[:, None]
    freqs = jnp.power(10000.0, -jnp.arange(dim, dtype=jnp.float32) / dim)   # (dim,)
    xf = jnp.arange(t_steps, dtype=jnp.float32)[:, None] * freqs[None, :]   # (T, dim)
    return jnp.concatenate([jnp.cos(xf), jnp.sin(xf)], axis=-1)             # (T, 128)


def _fwd_diffusion_kernel(x_ref, h_ref, zx_ref, batch_ref, tbl_ref,
                          pos_ref, attrs_ref):
    n = x_ref.shape[0]
    t_steps = tbl_ref.shape[0]

    x = x_ref[...]                      # (tn, 3)
    zx = zx_ref[...]                    # (tn, 3)  centered noise (computed in wrapper)
    batch = batch_ref[...]              # (tn, 1)  int32

    # table[batch] would raise in torch for batch >= T; clamp so garbage / padded rows
    # of a partial last tile stay well-defined (padded rows are masked on writeback).
    b = jnp.clip(batch, 0, t_steps - 1)

    # Fused gather: one one-hot matmul against the combined (T, 130) table instead of
    # three separate gathers (two of which would have 1-lane outputs -> wasted passes).
    # Kernel is HBM-bound; keep f32 so the result is exact vs. the f32 torch reference.
    col = jax.lax.broadcasted_iota(jnp.int32, (n, t_steps), 1)
    onehot = (col == b).astype(jnp.float32)                                   # (tn, T)
    gathered = jnp.dot(onehot, tbl_ref[...],
                       preferred_element_type=jnp.float32)                    # (tn, 130)

    emb_n = gathered[:, :EMB_W]                      # (tn, 128) time embedding per node
    sab_n = gathered[:, EMB_W:EMB_W + 1]             # (tn, 1) sqrt_alpha_bar[t]
    somab_n = gathered[:, EMB_W + 1:EMB_W + 2]       # (tn, 1) sqrt(1 - alpha_bar[t])

    pos_ref[...] = sab_n * x + somab_n * zx          # noised positions

    # Single full-tile store; column layout [h | emb] preserves the NODE_ATTRS contract.
    attrs_ref[...] = jnp.concatenate([h_ref[...], emb_n], axis=-1)


def _round_up(v, m):
    return (v + m - 1) // m * m


@functools.partial(jax.jit, static_argnames=("tile_n",))
def forward_diffusion(x, h, eps, batch, *, tile_n=1024):
    """x: (N,3) f32, h: (N,F) f32, eps: (N,3) f32 raw N(0,1), batch: (N,) int."""
    N, F = h.shape

    # ----- tiny parameter setup in plain JAX (T = 20 rows) -----
    sab, somab = ddpm_tables()
    emb_table = time_embedding_table()
    table = jnp.concatenate(
        [emb_table, sab[:, None], somab[:, None]], axis=-1).astype(jnp.float32)  # (T, 130)

    # center_pos: global mean over nodes, hoisted to XLA so node tiles are independent
    # (an axis-0 reduction cannot span grid steps); z_x doubles as noise_target, saving
    # one (N,3) kernel output DMA.
    # TODO(synk): if center_pos in the source repo centers per-graph, replace with a
    # segment mean over `batch`.
    z_x = (eps - jnp.mean(eps, axis=0, keepdims=True)).astype(jnp.float32)
    batch2 = batch.astype(jnp.int32)[:, None]          # (N, 1)

    # Node-axis tiling: <= tile_n rows per block, multiple of 8 sublanes. With the
    # default TN=1024 the double-buffered VMEM footprint is a few MB -> well under the
    # scoped limits on v5e/v6e/v7x, so no vmem_limit_bytes override is needed.
    tn = min(tile_n, _round_up(N, 8))
    grid = (pl.cdiv(N, tn),)

    def node_spec(width):
        return pl.BlockSpec((tn, width), lambda i: (i, 0))

    tbl_spec = pl.BlockSpec((T, TBL_W), lambda i: (0, 0))

    pos_out, attrs_out = pl.pallas_call(
        _fwd_diffusion_kernel,
        out_shape=(
            jax.ShapeDtypeStruct((N, 3), jnp.float32),
            jax.ShapeDtypeStruct((N, F + EMB_W), jnp.float32),
        ),
        grid=grid,
        in_specs=[
            node_spec(3),        # x (positions)
            node_spec(F),        # h (node attrs)
            node_spec(3),        # z_x (centered noise)
            node_spec(1),        # batch / timestep index
            tbl_spec,            # fused gather table (same block every step)
        ],
        out_specs=(node_spec(3), node_spec(F + EMB_W)),
        compiler_params=pltpu.CompilerParams(
            # node tiles are independent -> shard across multiple TensorCores
            dimension_semantics=("parallel",)),
    )(x.astype(jnp.float32), h.astype(jnp.float32), z_x, batch2, table)

    return pos_out, z_x, attrs_out


def _reference(x, h, eps, batch):
    sab, somab = ddpm_tables()
    emb = time_embedding_table()
    z_x = eps - jnp.mean(eps, axis=0, keepdims=True)
    sab_n = sab[batch][:, None]
    somab_n = somab[batch][:, None]
    pos = sab_n * x + somab_n * z_x
    attrs = jnp.concatenate([h, emb[batch]], axis=-1)
    return pos, z_x, attrs


if __name__ == "__main__":
    key = jax.random.PRNGKey(0)
    k1, k2, k3 = jax.random.split(key, 3)

    # Primary small test: 4 graphs x 8 nodes, node-attr width F = 16.
    num_graphs, nodes_per_graph, F = 4, 8, 16
    N = num_graphs * nodes_per_graph          # 32 nodes

    x = jax.random.normal(k1, (N, 3), dtype=jnp.float32)
    h = jax.random.normal(k2, (N, F), dtype=jnp.float32)
    eps = jax.random.normal(k3, (N, 3), dtype=jnp.float32)   # sample_noise_from_N_0_1
    batch = jnp.repeat(jnp.arange(num_graphs, dtype=jnp.int32), nodes_per_graph)

    pos_out, noise_tgt, attrs_out = forward_diffusion(x, h, eps, batch)
    jax.block_until_ready((pos_out, noise_tgt, attrs_out))

    pos_ref, noise_ref, attrs_ref = _reference(x, h, eps, batch)
    assert pos_out.shape == (N, 3)
    assert noise_tgt.shape == (N, 3)
    assert attrs_out.shape == (N, F + EMB_W)
    assert jnp.allclose(pos_out, pos_ref, atol=1e-5)
    assert jnp.allclose(noise_tgt, noise_ref, atol=1e-5)
    assert jnp.allclose(attrs_out, attrs_ref, atol=1e-5)

    # Multi-tile test (grid > 1, partial last block): 5 graphs x 8 nodes = 40 rows with
    # tile_n=16 -> 3 tiles, last tile half-full (exercises edge masking).
    num_graphs2, nodes_per_graph2 = 5, 8
    N2 = num_graphs2 * nodes_per_graph2
    k4, k5, k6 = jax.random.split(jax.random.PRNGKey(1), 3)
    x2 = jax.random.normal(k4, (N2, 3), dtype=jnp.float32)
    h2 = jax.random.normal(k5, (N2, F), dtype=jnp.float32)
    eps2 = jax.random.normal(k6, (N2, 3), dtype=jnp.float32)
    batch_2 = jnp.repeat(jnp.arange(num_graphs2, dtype=jnp.int32), nodes_per_graph2)

    pos2, noise2, attrs2 = forward_diffusion(x2, h2, eps2, batch_2, tile_n=16)
    jax.block_until_ready((pos2, noise2, attrs2))
    pos2_ref, noise2_ref, attrs2_ref = _reference(x2, h2, eps2, batch_2)
    assert jnp.allclose(pos2, pos2_ref, atol=1e-5)
    assert jnp.allclose(noise2, noise2_ref, atol=1e-5)
    assert jnp.allclose(attrs2, attrs2_ref, atol=1e-5)

    print("KERNEL_OK")
</pallas_src>

<mosaic_0001>
module attributes {stable_mosaic.version = 11 : i64} {
  func.func @_fwd_diffusion_kernel(%arg0: i32, %arg1: memref<32x3xf32, #tpu.memory_space<vmem>>, %arg2: memref<32x16xf32, #tpu.memory_space<vmem>>, %arg3: memref<32x3xf32, #tpu.memory_space<vmem>>, %arg4: memref<32x1xi32, #tpu.memory_space<vmem>>, %arg5: memref<20x130xf32, #tpu.memory_space<vmem>>, %arg6: memref<32x3xf32, #tpu.memory_space<vmem>>, %arg7: memref<32x144xf32, #tpu.memory_space<vmem>>) attributes {dimension_semantics = [#tpu.dimension_semantics<parallel>], iteration_bounds = array<i64: 1>, scalar_prefetch = 0 : i64, scratch_operands = 0 : i64, tpu.core_type = #tpu.core_type<tc>, window_params = [{transform_indices = @transform_0, window_bounds = array<i64: 32, 3>}, {transform_indices = @transform_1, window_bounds = array<i64: 32, 16>}, {transform_indices = @transform_2, window_bounds = array<i64: 32, 3>}, {transform_indices = @transform_3, window_bounds = array<i64: 32, 1>}, {pipeline_mode = #tpu.pipeline_mode<synchronous>, transform_indices = @transform_4, window_bounds = array<i64: 20, 130>}, {transform_indices = @transform_5, window_bounds = array<i64: 32, 3>}, {transform_indices = @transform_6, window_bounds = array<i64: 32, 144>}]} {
    %c0 = arith.constant 0 : index
    %c0_0 = arith.constant 0 : index
    %0 = vector.load %arg1[%c0, %c0_0] : memref<32x3xf32, #tpu.memory_space<vmem>>, vector<32x3xf32>
    %c0_1 = arith.constant 0 : index
    %c0_2 = arith.constant 0 : index
    %1 = vector.load %arg3[%c0_1, %c0_2] : memref<32x3xf32, #tpu.memory_space<vmem>>, vector<32x3xf32>
    %c0_3 = arith.constant 0 : index
    %c0_4 = arith.constant 0 : index
    %2 = vector.load %arg4[%c0_3, %c0_4] : memref<32x1xi32, #tpu.memory_space<vmem>>, vector<32x1xi32>
    %c0_i32 = arith.constant 0 : i32
    %c19_i32 = arith.constant 19 : i32
    %3 = vector.broadcast %c0_i32 : i32 to vector<32x1xi32>
    %4 = arith.maxsi %3, %2 : vector<32x1xi32>
    %5 = vector.broadcast %c19_i32 : i32 to vector<32x1xi32>
    %6 = arith.minsi %5, %4 : vector<32x1xi32>
    %7 = tpu.iota {dimensions = array<i32: 1>} : vector<32x20xi32>
    %8 = vector.broadcast %6 : vector<32x1xi32> to vector<32x20xi32>
    %9 = arith.cmpi eq, %7, %8 : vector<32x20xi32>
    %10 = arith.extui %9 : vector<32x20xi1> to vector<32x20xi32>
    %11 = arith.sitofp %10 : vector<32x20xi32> to vector<32x20xf32>
    %c0_5 = arith.constant 0 : index
    %c0_6 = arith.constant 0 : index
    %12 = vector.load %arg5[%c0_5, %c0_6] : memref<20x130xf32, #tpu.memory_space<vmem>>, vector<20x130xf32>
    %cst = arith.constant dense<0.000000e+00> : vector<32x130xf32>
    %13 = tpu.matmul %11, %12, %cst {dimension_numbers = #tpu.dot_dimension_numbers<[1], [0], [0], [1], [0, 0, 1, 1], [], []>} : vector<32x20xf32>, vector<20x130xf32>, vector<32x130xf32> -> vector<32x130xf32>
    %14 = vector.extract_strided_slice %13 {offsets = [0, 0], sizes = [32, 128], strides = [1, 1]} : vector<32x130xf32> to vector<32x128xf32>
    %15 = vector.extract_strided_slice %13 {offsets = [0, 128], sizes = [32, 1], strides = [1, 1]} : vector<32x130xf32> to vector<32x1xf32>
    %16 = vector.extract_strided_slice %13 {offsets = [0, 129], sizes = [32, 1], strides = [1, 1]} : vector<32x130xf32> to vector<32x1xf32>
    %17 = vector.broadcast %15 : vector<32x1xf32> to vector<32x3xf32>
    %18 = arith.mulf %17, %0 : vector<32x3xf32>
    %19 = vector.broadcast %16 : vector<32x1xf32> to vector<32x3xf32>
    %20 = arith.mulf %19, %1 : vector<32x3xf32>
    %21 = arith.addf %18, %20 : vector<32x3xf32>
    %c0_7 = arith.constant 0 : index
    %c0_8 = arith.constant 0 : index
    %22 = vector.load %arg6[%c0_7, %c0_8] : memref<32x3xf32, #tpu.memory_space<vmem>>, vector<32x3xf32>
    tpu.vector_store %arg6[%c0_7, %c0_8], %21 {strides = array<i32>} : memref<32x3xf32, #tpu.memory_space<vmem>>, vector<32x3xf32>,
    %c0_9 = arith.constant 0 : index
    %c0_10 = arith.constant 0 : index
    %23 = vector.load %arg2[%c0_9, %c0_10] : memref<32x16xf32, #tpu.memory_space<vmem>>, vector<32x16xf32>
    %24 = tpu.concatenate %23, %14 in 1 : vector<32x16xf32>, vector<32x128xf32> -> vector<32x144xf32>
    %c0_11 = arith.constant 0 : index
    %c0_12 = arith.constant 0 : index
    %25 = vector.load %arg7[%c0_11, %c0_12] : memref<32x144xf32, #tpu.memory_space<vmem>>, vector<32x144xf32>
    tpu.vector_store %arg7[%c0_11, %c0_12], %24 {strides = array<i32>} : memref<32x144xf32, #tpu.memory_space<vmem>>, vector<32x144xf32>,
    return
  }
  func.func @transform_0(%arg0: i32) -> (i32, i32) {
    %c0_i32 = arith.constant 0 : i32
    %c0_i32_0 = arith.constant 0 : i32
    return %arg0, %c0_i32 : i32, i32
  }
  func.func @transform_1(%arg0: i32) -> (i32, i32) {
    %c0_i32 = arith.constant 0 : i32
    %c0_i32_0 = arith.constant 0 : i32
    return %arg0, %c0_i32 : i32, i32
  }
  func.func @transform_2(%arg0: i32) -> (i32, i32) {
    %c0_i32 = arith.constant 0 : i32
    %c0_i32_0 = arith.constant 0 : i32
    return %arg0, %c0_i32 : i32, i32
  }
  func.func @transform_3(%arg0: i32) -> (i32, i32) {
    %c0_i32 = arith.constant 0 : i32
    %c0_i32_0 = arith.constant 0 : i32
    return %arg0, %c0_i32 : i32, i32
  }
  func.func @transform_4(%arg0: i32) -> (i32, i32) {
    %c0_i32 = arith.constant 0 : i32
    %c0_i32_0 = arith.constant 0 : i32
    %c0_i32_1 = arith.constant 0 : i32
    return %c0_i32, %c0_i32_0 : i32, i32
  }
  func.func @transform_5(%arg0: i32) -> (i32, i32) {
    %c0_i32 = arith.constant 0 : i32
    %c0_i32_0 = arith.constant 0 : i32
    return %arg0, %c0_i32 : i32, i32
  }
  func.func @transform_6(%arg0: i32) -> (i32, i32) {
    %c0_i32 = arith.constant 0 : i32
    %c0_i32_0 = arith.constant 0 : i32
    return %arg0, %c0_i32 : i32, i32
  }
}

</mosaic_0001>

<llo_original>
// kernel: forward_diffusion.1
$region0: #{forward_diffusion.1}
  #allocation0 [shape = 'u32[]', space=smem, size = 0x4, offset = 0x4, fixed_abs, tag = 'smem constant byte address 0x4 - core index']
  #allocation1 [shape = 'u32[144,128]{1,0:T(1,128)}', space=vmem, size = 0x12000, scoped, tag = 'internal scratch']
  %s0 = inlined_call_operand.vmem [shape: f32[32,3], index: 0, kind: input, shape index: {}]
  %s1 = inlined_call_operand.vmem [shape: f32[32,16], index: 1, kind: input, shape index: {}]
  %s2 = inlined_call_operand.vmem [shape: f32[32,3], index: 2, kind: input, shape index: {}]
  %s3 = inlined_call_operand.vmem [shape: s32[32,1], index: 3, kind: input, shape index: {}]
  %s4 = inlined_call_operand.vmem [shape: f32[20,130], index: 4, kind: input, shape index: {}]
  %s5 = inlined_call_operand.vmem [shape: f32[32,3], index: 5, kind: output, shape index: {0}]
  %s6 = inlined_call_operand.hbm [shape: f32[32,144], index: 6, kind: output, shape index: {1}]
  %7 = xla_tuple %s5, %s6
  %s8 = sld [smem:[#allocation0]]
  $region38: #{forward_diffusion.1} parent=0
    _
  %s10 = ssub.s32 1, %s8
  %s11 = scalar_select 0, %s10, %s8
  $region1: #{forward_diffusion.1} parent=0
    #allocation2 [shape = 'u8[32768]{0}', space=vmem, size = 0x8000, scoped, tag = 'output window, operand 1, single buffered']
    #allocation3 [shape = 's32[1]{0}', space=sflag, size = 0x4, scoped, tag = 'scoped memory for forward_diffusion.1']
    %12 = vsyncpa [#allocation3], 0
    // Predicated region
    $region2: #{forward_diffusion.1} parent=1 // pred_check
      _
    $region3: #{forward_diffusion.1} parent=1 // pred_check_branch
      %14 = sbr.rel (0) target = $region5
    $region4: #{forward_diffusion.1} parent=1 // pred_region
      _
    $region5: #{forward_diffusion.1} parent=1 // pred_fallthru
      _
    // Predicated region
    $region6: #{forward_diffusion.1} parent=1 // pred_check
      _
    $region7: #{forward_diffusion.1} parent=1 // pred_check_branch
      %16 = sbr.rel (0) target = $region9
    $region8: #{forward_diffusion.1} parent=1 // pred_region
      _
    $region9: #{forward_diffusion.1} parent=1 // pred_fallthru
      _
    // Predicated region
    $region10: #{forward_diffusion.1} parent=1 // pred_check
      _
    $region11: #{forward_diffusion.1} parent=1 // pred_check_branch
      %18 = sbr.rel (0) target = $region13
    $region12: #{forward_diffusion.1} parent=1 // pred_region
      _
    $region13: #{forward_diffusion.1} parent=1 // pred_fallthru
      _
    // Predicated region
    $region14: #{forward_diffusion.1} parent=1 // pred_check
      _
    $region15: #{forward_diffusion.1} parent=1 // pred_check_branch
      %20 = sbr.rel (0) target = $region17
    $region16: #{forward_diffusion.1} parent=1 // pred_region
      _
    $region17: #{forward_diffusion.1} parent=1 // pred_fallthru
      _
    // Predicated region
    $region18: #{forward_diffusion.1} parent=1 // pred_check
      _
    $region19: #{forward_diffusion.1} parent=1 // pred_check_branch
      %22 = sbr.rel (0) target = $region21
    $region20: #{forward_diffusion.1} parent=1 // pred_region
      _
    $region21: #{forward_diffusion.1} parent=1 // pred_fallthru
      _
    %v23 = vld [vmem:[%s0] sm:$0xff]
    %v24 = vld [vmem:[%s0 + $0x8] sm:$0xff]
    %v25 = vld [vmem:[%s0 + $0x10] sm:$0xff]
    %v26 = vld [vmem:[%s0 + $0x18] sm:$0xff]
    %v27 = vld [vmem:[%s2] sm:$0xff]
    %v28 = vld [vmem:[%s2 + $0x8] sm:$0xff]
    %v29 = vld [vmem:[%s2 + $0x10] sm:$0xff]
    %v30 = vld [vmem:[%s2 + $0x18] sm:$0xff]
    %v31 = vld [vmem:[%s3] sm:$0xff]
    %v32 = vld [vmem:[%s3 + $0x8] sm:$0xff]
    %v33 = vld [vmem:[%s3 + $0x10] sm:$0xff]
    %v34 = vld [vmem:[%s3 + $0x18] sm:$0xff]
    %vm35 = vcmp.gt.s32.totalorder %v31, 0
    %v36 = vsel %vm35, %v31, 0
    %vm37 = vcmp.gt.s32.totalorder %v32, 0
    %v38 = vsel %vm37, %v32, 0
    %vm39 = vcmp.gt.s32.totalorder %v33, 0
    %v40 = vsel %vm39, %v33, 0
    %vm41 = vcmp.gt.s32.totalorder %v34, 0
    %v42 = vsel %vm41, %v34, 0
    %vm43 = vcmp.lt.s32.totalorder %v36, 19
    %v44 = vsel %vm43, %v36, 19
    %vm45 = vcmp.lt.s32.totalorder %v38, 19
    %v46 = vsel %vm45, %v38, 19
    %vm47 = vcmp.lt.s32.totalorder %v40, 19
    %v48 = vsel %vm47, %v40, 19
    %vm49 = vcmp.lt.s32.totalorder %v42, 19
    %v50 = vsel %vm49, %v42, 19
    %v51 = vlaneseq
    %v52 = vand.u32 %v51, 127
    %53 = vset.pattern.permute.xlu0 0
    %54 = vperm.xlu0 %53, %v44
    %v55 = vpop.permute.xlu0 %54
    %56 = vset.pattern.permute.xlu0 0
    %57 = vperm.xlu0 %56, %v46
    %v58 = vpop.permute.xlu0 %57
    %59 = vset.pattern.permute.xlu0 0
    %60 = vperm.xlu0 %59, %v48
    %v61 = vpop.permute.xlu0 %60
    %62 = vset.pattern.permute.xlu0 0
    %63 = vperm.xlu0 %62, %v50
    %v64 = vpop.permute.xlu0 %63
    %vm65 = vcmp.eq.s32.totalorder %v52, %v55
    %vm66 = vcmp.eq.s32.totalorder %v52, %v58
    %vm67 = vcmp.eq.s32.totalorder %v52, %v61
    %vm68 = vcmp.eq.s32.totalorder %v52, %v64
    %v69 = vsel %vm65, 1, 0
    %v70 = vsel %vm66, 1, 0
    %v71 = vsel %vm67, 1, 0
    %v72 = vsel %vm68, 1, 0
    %v73 = vcvt.s32.f32 %v69
    %v74 = vcvt.s32.f32 %v70
    %v75 = vcvt.s32.f32 %v71
    %v76 = vcvt.s32.f32 %v72
    %v77 = vld [vmem:[%s4] sm:$0xff]
    %v78 = vld [vmem:[%s4 + $0x8] sm:$0xff]
    %v79 = vld [vmem:[%s4 + $0x10] sm:$0xff]
    %v80 = vld [vmem:[%s4 + $0x18] sm:$0xff]
    %v81 = vld [vmem:[%s4 + $0x20] sm:$0xf]
    %v82 = vld [vmem:[%s4 + $0x28] sm:$0xf]
    %vm83 = vcmask 162816
    %v85 = vsel %vm83, %v73, 0
    %v88 = vsel %vm83, %v74, 0
    %v91 = vsel %vm83, %v75, 0
    %v94 = vsel %vm83, %v76, 0
    %vm96 = vcmask 1043456
    %v98 = vsel %vm96, %v81, 0
    %v101 = vsel %vm96, %v82, 0
    %103 = vmatprep.subr.mxu0 %v78
    %104 = vmatpush1.msra.mxu0 %v77
    %105 = vmatprep.subr.mxu0 %v80
    %106 = vmatpush1.msra.mxu0 %v79
    %107 = vmatprep.subr.mxu0 %v101
    %108 = vmatpush1.msra.mxu0 %v98
    %109 = vmatprep.subr.mxu0 0.0
    %110 = vmatpush1.msra.mxu0 0.0
    %111 = vmatprep.subr.mxu0 0.0
    %112 = vmatpush1.msra.mxu0 0.0
    %113 = vmatprep.subr.mxu0 0.0
    %114 = vmatpush1.msra.mxu0 0.0
    %115 = vmatprep.subr.mxu0 0.0
    %116 = vmatpush1.msra.mxu0 0.0
    %117 = vmatprep.subr.mxu0 0.0
    %118 = vmatpush1.msra.mxu0 0.0
    %119 = vmatprep.subr.mxu0 0.0
    %120 = vmatpush1.msra.mxu0 0.0
    %121 = vmatprep.subr.mxu0 0.0
    %122 = vmatpush1.msra.mxu0 0.0
    %123 = vmatprep.subr.mxu0 0.0
    %124 = vmatpush1.msra.mxu0 0.0
    %125 = vmatprep.subr.mxu0 0.0
    %126 = vmatpush1.msra.mxu0 0.0
    %127 = vmatprep.subr.mxu0 0.0
    %128 = vmatpush1.msra.mxu0 0.0
    %129 = vmatprep.subr.mxu0 0.0
    %130 = vmatpush1.msra.mxu0 0.0
    %131 = vmatprep.subr.mxu0 0.0
    %132 = vmatpush1.msra.mxu0 0.0
    %133 = vmatprep.subr.mxu0 0.0
    %134 = vmatpush1.msra.mxu0 0.0
    %135 = vmatprep.subr.mxu0 0.0
    %136 = vmatpush1.msra.mxu0 0.0
    %137 = vmatprep.subr.mxu0 0.0
    %138 = vmatpush1.msra.mxu0 0.0
    %139 = vmatprep.subr.mxu0 0.0
    %140 = vmatpush1.msra.mxu0 0.0
    %141 = vmatprep.subr.mxu0 0.0
    %142 = vmatpush1.msra.mxu0 0.0
    %143 = vmatprep.subr.mxu0 0.0
    %144 = vmatpush1.msra.mxu0 0.0
    %145 = vmatprep.subr.mxu0 0.0
    %146 = vmatpush1.msra.mxu0 0.0
    %147 = vmatprep.subr.mxu0 0.0
    %148 = vmatpush1.msra.mxu0 0.0
    %149 = vmatprep.subr.mxu0 0.0
    %150 = vmatpush1.msra.mxu0 0.0
    %151 = vmatprep.subr.mxu0 0.0
    %152 = vmatpush1.msra.mxu0 0.0
    %153 = vmatprep.subr.mxu0 0.0
    %154 = vmatpush1.msra.mxu0 0.0
    %155 = vmatprep.subr.mxu0 0.0
    %156 = vmatpush1.msra.mxu0 0.0
    %157 = vmatprep.subr.mxu0 0.0
    %158 = vmatpush1.msra.mxu0 0.0
    %159 = vmatprep.subr.mxu0 0.0
    %160 = vmatpush1.msra.mxu0 0.0
    %161 = vmatprep.subr.mxu0 0.0
    %162 = vmatpush1.msra.mxu0 0.0
    %163 = vmatprep.subr.mxu0 0.0
    %164 = vmatpush1.msra.mxu0 0.0
    %165 = vmatprep.subr.mxu0 0.0
    %166 = vmatpush1.msra.mxu0 0.0
    %167 = vmatprep.mubr.f32.mxu0 0.0
    %168 = vmatmul.mubr.f32.gmra.mrb[0].mxu0 %v85
    %v169 = vpop.f32.mrb[0].mxu0
    %v170 = vadd.f32 0.0, %v169
    %v171 = vpop.f32.mrb[0].mxu0
    %v172 = vadd.f32 0.0, %v171
    %173 = vmatprep.mubr.f32.mxu0 0.0
    %174 = vmatmul.mubr.f32.gmra.mrb[0].mxu0 %v88
    %v175 = vpop.f32.mrb[0].mxu0
    %v176 = vadd.f32 0.0, %v175
    %v177 = vpop.f32.mrb[0].mxu0
    %v178 = vadd.f32 0.0, %v177
    %179 = vmatprep.mubr.f32.mxu0 0.0
    %180 = vmatmul.mubr.f32.gmra.mrb[0].mxu0 %v91
    %v181 = vpop.f32.mrb[0].mxu0
    %v182 = vadd.f32 0.0, %v181
    %v183 = vpop.f32.mrb[0].mxu0
    %v184 = vadd.f32 0.0, %v183
    %185 = vmatprep.mubr.f32.mxu0 0.0
    %186 = vmatmul.mubr.f32.gmra.mrb[0].mxu0 %v94
    %v187 = vpop.f32.mrb[0].mxu0
    %v188 = vadd.f32 0.0, %v187
    %v189 = vpop.f32.mrb[0].mxu0
    %v190 = vadd.f32 0.0, %v189
    %191 = vdwg.mxu0
    %193 = vset.pattern.permute.xlu0 0
    %194 = vperm.xlu0 %193, %v172
    %v195 = vpop.permute.xlu0 %194
    %198 = vset.pattern.permute.xlu0 0
    %199 = vperm.xlu0 %198, %v178
    %v200 = vpop.permute.xlu0 %199
    %203 = vset.pattern.permute.xlu0 0
    %204 = vperm.xlu0 %203, %v184
    %v205 = vpop.permute.xlu0 %204
    %208 = vset.pattern.permute.xlu0 0
    %209 = vperm.xlu0 %208, %v190
    %v210 = vpop.permute.xlu0 %209
    %v212 = vmul.f32 %v195, %v23
    %v213 = vmul.f32 %v200, %v24
    %v214 = vmul.f32 %v205, %v25
    %v215 = vmul.f32 %v210, %v26
    %216 = vset.pattern.permute.xlu0 1
    %217 = vperm.xlu0 %216, %v172
    %v218 = vpop.permute.xlu0 %217
    %220 = vset.pattern.permute.xlu0 1
    %221 = vperm.xlu0 %220, %v178
    %v222 = vpop.permute.xlu0 %221
    %224 = vset.pattern.permute.xlu0 1
    %225 = vperm.xlu0 %224, %v184
    %v226 = vpop.permute.xlu0 %225
    %228 = vset.pattern.permute.xlu0 1
    %229 = vperm.xlu0 %228, %v190
    %v230 = vpop.permute.xlu0 %229
    %v232 = vmul.f32 %v218, %v27
    %v233 = vmul.f32 %v222, %v28
    %v234 = vmul.f32 %v226, %v29
    %v235 = vmul.f32 %v230, %v30
    %v236 = vadd.f32 %v212, %v232
    %v237 = vadd.f32 %v213, %v233
    %v238 = vadd.f32 %v214, %v234
    %v239 = vadd.f32 %v215, %v235
    %vm240 = vcmask 23552
    %241 = vst.msk [vmem:[%s5] sm:$0xff] %vm240, %v236
    %242 = vst.msk [vmem:[%s5 + $0x8] sm:$0xff] %vm240, %v237
    %243 = vst.msk [vmem:[%s5 + $0x10] sm:$0xff] %vm240, %v238
    %244 = vst.msk [vmem:[%s5 + $0x18] sm:$0xff] %vm240, %v239
    %v245 = vld [vmem:[%s1] sm:$0xff]
    %v246 = vld [vmem:[%s1 + $0x8] sm:$0xff]
    %v247 = vld [vmem:[%s1 + $0x10] sm:$0xff]
    %v248 = vld [vmem:[%s1 + $0x18] sm:$0xff]
    %253 = vrot.lane.b32.xlu0 %v170, 16
    %v254 = vpop.permute.xlu0 %253
    %255 = vrot.lane.b32.xlu0 %v176, 16
    %v256 = vpop.permute.xlu0 %255
    %257 = vrot.lane.b32.xlu0 %v182, 16
    %v258 = vpop.permute.xlu0 %257
    %259 = vrot.lane.b32.xlu0 %v188, 16
    %v260 = vpop.permute.xlu0 %259
    %vm265 = vcmask 130048
    %v266 = vsel %vm265, %v245, %v254
    %v267 = vsel %vm265, %v246, %v256
    %v268 = vsel %vm265, %v247, %v258
    %v269 = vsel %vm265, %v248, %v260
    %270 = vst [vmem:[#allocation2] sm:$0xff] %v266
    %271 = vst.msk [vmem:[#allocation2 + $0x8] sm:$0xff] %vm265, %v254
    %272 = vst [vmem:[#allocation2 + $0x10] sm:$0xff] %v267
    %273 = vst.msk [vmem:[#allocation2 + $0x18] sm:$0xff] %vm265, %v256
    %274 = vst [vmem:[#allocation2 + $0x20] sm:$0xff] %v268
    %275 = vst.msk [vmem:[#allocation2 + $0x28] sm:$0xff] %vm265, %v258
    %276 = vst [vmem:[#allocation2 + $0x30] sm:$0xff] %v269
    %277 = vst.msk [vmem:[#allocation2 + $0x38] sm:$0xff] %vm265, %v260
    // Predicated region
    $region22: #{forward_diffusion.1} parent=1 // pred_check
      _
    $region23: #{forward_diffusion.1} parent=1 // pred_check_branch
      %279 = sbr.rel (0) target = $region25
    $region24: #{forward_diffusion.1} parent=1 // pred_region
      _
    $region25: #{forward_diffusion.1} parent=1 // pred_fallthru
      _
    // Predicated region
    $region26: #{forward_diffusion.1} parent=1 // pred_check
      _
    $region27: #{forward_diffusion.1} parent=1 // pred_check_branch
      %281 = sbr.rel (0) target = $region29
    $region28: #{forward_diffusion.1} parent=1 // pred_region
      %s283 = ssub.s32 1024, 1024
      %284 = vsyncadd [#allocation3], %s283
      %s285 = sshll.u32 [#allocation2], 4
      %s286 = int_to_ptr.vmem [resolvable:$true] %s285
      %291 = dma.vmem_to_hbm [thread:$0]  %s286, 1024, %s6, [#allocation3], 256, 256, 16
    $region29: #{forward_diffusion.1} parent=1 // pred_fallthru
      _
    // Predicated region
    $region30: #{forward_diffusion.1} parent=1 // pred_check
      _
    $region31: #{forward_diffusion.1} parent=1 // pred_check_branch
      %293 = sbr.rel (0) target = $region33
    $region32: #{forward_diffusion.1} parent=1 // pred_region
      _
    $region33: #{forward_diffusion.1} parent=1 // pred_fallthru
      _
    // Predicated region
    $region34: #{forward_diffusion.1} parent=1 // pred_check
      _
    $region35: #{forward_diffusion.1} parent=1 // pred_check_branch
      %295 = sbr.rel (0) target = $region37
    $region36: #{forward_diffusion.1} parent=1 // pred_region
      %296 = dma.done [#allocation3], 1024
    $region37: #{forward_diffusion.1} parent=1 // pred_fallthru
      _
    %297 = vsyncpa [#allocation3], 1

</llo_original>
